<compile_context>
chip_gen: v7x
topology: tpu7x:2x2x1
jax: 0.10.0
libtpu: 0.0.40
codegen_flags: <defaults>
</compile_context>

<pallas_src>
import functools

import jax
import jax.numpy as jnp
import numpy as np
from jax.experimental import pallas as pl
from jax.experimental.pallas import tpu as pltpu


def _elementwise_dtype():
    """bf16 elementwise (silu / CFG-mix) on v6e/v7x which have bf16 VPU+EUP;
    f32 on v5e (no bf16 VPU/EUP) and anything unknown."""
    try:
        kind = jax.devices()[0].device_kind.lower()
    except Exception:
        return jnp.float32
    if "v6" in kind or "v7" in kind:
        return jnp.bfloat16
    return jnp.float32


def _pick_spatial_tile(hw, *, C, Hd, batch, ew_bytes, vmem_budget=40 * 2**20):
    """Pick the lane-axis spatial tile and an explicit VMEM limit.

    The tile is the largest divisor of HW that is a multiple of 128 (or the
    full extent) whose live buffers fit a budget that is safe even on v7x's
    64 MiB per-TensorCore VMEM:
        x in  : 2 (double-buffer) * C * 4 B / lane   (f32 input)
        out   : 2 * C * 4 B / lane                   (f32 output)
        hidden: ~3 live (Hd,) elementwise temporaries / lane
    When batch == 1 the tile is halved (if 128-aligned) so v7x's two
    TensorCores both get a grid step.
    """
    per_lane = 2 * C * 4 + 2 * C * 4 + 3 * Hd * ew_bytes
    max_lanes = max(128, (vmem_budget // per_lane) // 128 * 128)

    if hw <= max_lanes:
        tile = hw
    else:
        tile = None
        start = min(max_lanes, hw - hw % 128)
        for t in range(start, 0, -128):
            if hw % t == 0:
                tile = t
                break
        if tile is None:
            # No 128-aligned divisor: fall back to one full-extent tile.
            # TODO(synk): for very large oddly-shaped latents this can exceed
            # the budget; would need masked partial tiles instead.
            tile = hw

    # v7x has 2 TensorCores: keep >= 2 total "parallel" grid steps.
    if batch == 1 and tile == hw and hw % 256 == 0:
        tile = hw // 2

    # Explicit scoped-VMEM limit (default is only 32 MiB): cover the chosen
    # tile with headroom, capped below v7x's 64 MiB physical VMEM.
    weights_bytes = 2 * (Hd * C * 2) * 2 + 2 * Hd * 128 * 4  # W1+W2 (bf16) + padded bias
    need = per_lane * tile + weights_bytes
    vmem_limit = int(min(56 * 2**20, max(32 * 2**20, int(need * 1.5))))
    return tile, vmem_limit


# ---------------------------------------------------------------------------
# Pallas kernel: one grid step == (one batch element, one spatial tile).
# Computes both CFG branches of the inner model and the guidance combine,
# with the combine algebraically folded *before* the second matmul.
# ---------------------------------------------------------------------------
def cfg_denoiser_kernel(x_ref, w1_ref, w2_ref, bias_ref, sig_ref, cs_ref, o_ref,
                        *, ew_dtype):
    b = pl.program_id(0)

    # x arrives in its native f32; cast to bf16 in-kernel for the MXU
    # (free VPU work here - no extra wrapper-side HBM pass).
    x = x_ref[0].astype(jnp.bfloat16)                   # (C, tHW)
    w1 = w1_ref[...]                                    # (Hd, C) bf16
    w2 = w2_ref[...]                                    # (C, Hd) bf16

    # Shared first matmul: x_in = cat([x, x]) -> both branches see the same x.
    h = jnp.dot(w1, x, preferred_element_type=jnp.float32)   # (Hd, tHW) f32
    h = h.astype(ew_dtype)

    bias = bias_ref[0].astype(ew_dtype)                 # (Hd, 2): [:,0]=uncond, [:,1]=cond
    bu = bias[:, 0:1]                                   # (Hd, 1)
    bc = bias[:, 1:2]                                   # (Hd, 1)

    def _silu(z):
        # silu(z) = z * sigmoid(z);  sigmoid(z) = 0.5*(tanh(0.5*z)+1)
        # -> one EUP transcendental per element (instead of exp + divide).
        return z * (0.5 * jnp.tanh(0.5 * z) + 0.5)

    # CFG combine folded before W2 (linearity of the second matmul):
    #   out = sig * W2 @ ((1 - cs) * silu(h + bu) + cs * silu(h + bc))
    # h is consumed in place; at most ~2 hidden-sized buffers stay live.
    cs = cs_ref[0].astype(ew_dtype)                     # cond_scale scalar (SMEM)
    h_mix = (1.0 - cs) * _silu(h + bu)
    h_mix = h_mix + cs * _silu(h + bc)                  # (Hd, tHW) ew_dtype

    sig = sig_ref[b]                                    # per-batch c_out scale (SMEM, f32)
    eps = jnp.dot(w2, h_mix.astype(jnp.bfloat16),
                  preferred_element_type=jnp.float32)   # (C, tHW) f32
    o_ref[0] = eps * sig


# ---------------------------------------------------------------------------
# Wrapper (glue in plain JAX: pooled text embedding, sigma scale, reshapes)
# ---------------------------------------------------------------------------
def cfg_denoiser(x, sigma, uncond, cond, cond_scale, params):
    """x: (B, C, H, W) f32, sigma: (B,) f32, uncond/cond: (B, S, D) f32."""
    B, C, H, W = x.shape
    HW = H * W
    W1, W2, Wc = params["W1"], params["W2"], params["Wc"]
    Hd = W1.shape[0]

    # Conditioning biases: mean-pool the context tokens, project to Hd.
    # Packed into one (B, Hd, 2) block -> a single tiny DMA, hoisted across
    # the spatial grid axis.
    bias_u = jnp.mean(uncond, axis=1) @ Wc               # (B, Hd)
    bias_c = jnp.mean(cond, axis=1) @ Wc                 # (B, Hd)
    bias = jnp.stack([bias_u, bias_c], axis=-1).astype(jnp.float32)  # (B, Hd, 2)

    # sigma-dependent output scale (c_out style): 1/sqrt(sigma^2+1) -> SMEM.
    sig_scale = (1.0 / jnp.sqrt(sigma * sigma + 1.0)).astype(jnp.float32)  # (B,)
    cs = jnp.full((1,), cond_scale, dtype=jnp.float32)                     # (1,)

    # x stays f32: no wrapper-side astype (that would be an extra full HBM
    # read+write pass of the latent); bf16 cast happens inside the kernel.
    x_flat = x.reshape(B, C, HW)
    w1_b = W1.astype(jnp.bfloat16)
    w2_b = W2.astype(jnp.bfloat16)

    ew_dtype = _elementwise_dtype()
    tHW, vmem_limit = _pick_spatial_tile(
        HW, C=C, Hd=Hd, batch=B, ew_bytes=jnp.dtype(ew_dtype).itemsize)
    n_hw = HW // tHW

    kernel = functools.partial(cfg_denoiser_kernel, ew_dtype=ew_dtype)

    out_flat = pl.pallas_call(
        kernel,
        out_shape=jax.ShapeDtypeStruct((B, C, HW), jnp.float32),
        grid_spec=pltpu.PrefetchScalarGridSpec(
            num_scalar_prefetch=0,
            grid=(B, n_hw),
            in_specs=[
                pl.BlockSpec((1, C, tHW), lambda b, s: (b, 0, s)),   # x tile (f32)
                pl.BlockSpec((Hd, C), lambda b, s: (0, 0)),          # W1 (bf16)
                pl.BlockSpec((C, Hd), lambda b, s: (0, 0)),          # W2 (bf16)
                pl.BlockSpec((1, Hd, 2), lambda b, s: (b, 0, 0)),    # packed biases
                pl.BlockSpec(memory_space=pltpu.MemorySpace.SMEM),   # sigma scale (B,)
                pl.BlockSpec(memory_space=pltpu.MemorySpace.SMEM),   # cond_scale (1,)
            ],
            out_specs=pl.BlockSpec((1, C, tHW), lambda b, s: (b, 0, s)),
        ),
        compiler_params=pltpu.CompilerParams(
            dimension_semantics=("parallel", "parallel"),
            vmem_limit_bytes=vmem_limit),
    )(x_flat, w1_b, w2_b, bias, sig_scale, cs)

    return out_flat.reshape(B, C, H, W)


# ---------------------------------------------------------------------------
# Pure-JAX reference replicating the torch semantics literally (all f32):
# cat -> inner_model -> chunk -> combine.
# ---------------------------------------------------------------------------
def _inner_model_ref(x_in, sigma_in, cond_in, params):
    B2, C, H, W = x_in.shape
    x_flat = x_in.reshape(B2, C, H * W)
    c_emb = jnp.mean(cond_in, axis=1) @ params["Wc"]            # (2B, Hd)
    sig = 1.0 / jnp.sqrt(sigma_in * sigma_in + 1.0)             # (2B,)
    h = jnp.einsum("hc,bcs->bhs", params["W1"], x_flat) + c_emb[:, :, None]
    h = jax.nn.silu(h)
    out = jnp.einsum("ch,bhs->bcs", params["W2"], h) * sig[:, None, None]
    return out.reshape(B2, C, H, W)


def cfg_denoiser_ref(x, sigma, uncond, cond, cond_scale, params):
    x_in = jnp.concatenate([x] * 2)
    sigma_in = jnp.concatenate([sigma] * 2)
    cond_in = jnp.concatenate([uncond, cond])
    out = _inner_model_ref(x_in, sigma_in, cond_in, params)
    u, c = jnp.split(out, 2)
    return u + (c - u) * cond_scale


# ---------------------------------------------------------------------------
if __name__ == "__main__":
    B, C, H, W = 2, 4, 16, 16     # latent, like SD latents at tiny scale
    S, D = 8, 32                  # text context: seq=8, hidden=32
    Hd = 32                       # inner model hidden channels

    key = jax.random.PRNGKey(0)
    kx, ks, ku, kc, k1, k2, k3 = jax.random.split(key, 7)

    x = jax.random.normal(kx, (B, C, H, W), dtype=jnp.float32)
    sigma = jax.random.uniform(ks, (B,), dtype=jnp.float32, minval=0.5, maxval=5.0)
    uncond = jax.random.normal(ku, (B, S, D), dtype=jnp.float32)
    cond = jax.random.normal(kc, (B, S, D), dtype=jnp.float32)
    cond_scale = 7.5

    params = {
        "W1": jax.random.normal(k1, (Hd, C), dtype=jnp.float32) * 0.1,
        "W2": jax.random.normal(k2, (C, Hd), dtype=jnp.float32) * 0.1,
        "Wc": jax.random.normal(k3, (D, Hd), dtype=jnp.float32) * 0.1,
    }

    out = cfg_denoiser(x, sigma, uncond, cond, cond_scale, params)
    out = jax.block_until_ready(out)

    ref = cfg_denoiser_ref(x, sigma, uncond, cond, cond_scale, params)
    # Kernel runs bf16 MXU operands (+ bf16 elementwise on v6e/v7x) vs. the
    # all-f32 reference; CFG amplifies rounding by cond_scale -> wide tolerance.
    np.testing.assert_allclose(np.asarray(out), np.asarray(ref),
                               rtol=3e-2, atol=3e-2)

    print("KERNEL_OK")
</pallas_src>

<mosaic_0001>
module attributes {stable_mosaic.version = 11 : i64} {
  func.func @cfg_denoiser_kernel(%arg0: i32, %arg1: i32, %arg2: memref<1x4x256xf32, #tpu.memory_space<vmem>>, %arg3: memref<32x4xbf16, #tpu.memory_space<vmem>>, %arg4: memref<4x32xbf16, #tpu.memory_space<vmem>>, %arg5: memref<1x32x2xf32, #tpu.memory_space<vmem>>, %arg6: memref<2xf32, #tpu.memory_space<smem>>, %arg7: memref<1xf32, #tpu.memory_space<smem>>, %arg8: memref<1x4x256xf32, #tpu.memory_space<vmem>>) attributes {dimension_semantics = [#tpu.dimension_semantics<parallel>, #tpu.dimension_semantics<parallel>], iteration_bounds = array<i64: 2, 1>, scalar_prefetch = 0 : i64, scratch_operands = 0 : i64, tpu.core_type = #tpu.core_type<tc>, window_params = [{transform_indices = @transform_0, window_bounds = array<i64: 1, 4, 256>}, {pipeline_mode = #tpu.pipeline_mode<synchronous>, transform_indices = @transform_1, window_bounds = array<i64: 32, 4>}, {pipeline_mode = #tpu.pipeline_mode<synchronous>, transform_indices = @transform_2, window_bounds = array<i64: 4, 32>}, {transform_indices = @transform_3, window_bounds = array<i64: 1, 32, 2>}, {transform_indices = @transform_4, window_bounds = array<i64: 2>}, {transform_indices = @transform_5, window_bounds = array<i64: 1>}, {transform_indices = @transform_6, window_bounds = array<i64: 1, 4, 256>}]} {
    %c0 = arith.constant 0 : index
    %c0_0 = arith.constant 0 : index
    %c0_1 = arith.constant 0 : index
    %0 = vector.load %arg2[%c0, %c0_0, %c0_1] : memref<1x4x256xf32, #tpu.memory_space<vmem>>, vector<1x4x256xf32>
    %1 = vector.shape_cast %0 : vector<1x4x256xf32> to vector<4x256xf32>
    %2 = arith.truncf %1 : vector<4x256xf32> to vector<4x256xbf16>
    %c0_2 = arith.constant 0 : index
    %c0_3 = arith.constant 0 : index
    %3 = vector.load %arg3[%c0_2, %c0_3] : memref<32x4xbf16, #tpu.memory_space<vmem>>, vector<32x4xbf16>
    %c0_4 = arith.constant 0 : index
    %c0_5 = arith.constant 0 : index
    %4 = vector.load %arg4[%c0_4, %c0_5] : memref<4x32xbf16, #tpu.memory_space<vmem>>, vector<4x32xbf16>
    %cst = arith.constant dense<0.000000e+00> : vector<32x256xf32>
    %5 = tpu.matmul %3, %2, %cst {dimension_numbers = #tpu.dot_dimension_numbers<[1], [0], [0], [1], [0, 0, 1, 1], [], []>} : vector<32x4xbf16>, vector<4x256xbf16>, vector<32x256xf32> -> vector<32x256xf32>
    %c0_6 = arith.constant 0 : index
    %c0_7 = arith.constant 0 : index
    %c0_8 = arith.constant 0 : index
    %6 = vector.load %arg5[%c0_6, %c0_7, %c0_8] : memref<1x32x2xf32, #tpu.memory_space<vmem>>, vector<1x32x2xf32>
    %7 = vector.shape_cast %6 : vector<1x32x2xf32> to vector<32x2xf32>
    %8 = vector.extract_strided_slice %7 {offsets = [0, 0], sizes = [32, 1], strides = [1, 1]} : vector<32x2xf32> to vector<32x1xf32>
    %9 = vector.extract_strided_slice %7 {offsets = [0, 1], sizes = [32, 1], strides = [1, 1]} : vector<32x2xf32> to vector<32x1xf32>
    %c0_9 = arith.constant 0 : index
    %10 = memref.load %arg7[%c0_9] : memref<1xf32, #tpu.memory_space<smem>>
    %cst_10 = arith.constant 1.000000e+00 : f32
    %11 = arith.subf %cst_10, %10 : f32
    %12 = vector.broadcast %8 : vector<32x1xf32> to vector<32x256xf32>
    %13 = arith.addf %5, %12 : vector<32x256xf32>
    %cst_11 = arith.constant 5.000000e-01 : f32
    %14 = vector.broadcast %cst_11 : f32 to vector<32x256xf32>
    %15 = arith.mulf %14, %13 : vector<32x256xf32>
    %16 = math.tanh %15 : vector<32x256xf32>
    %cst_12 = arith.constant 5.000000e-01 : f32
    %17 = vector.broadcast %cst_12 : f32 to vector<32x256xf32>
    %18 = arith.mulf %17, %16 : vector<32x256xf32>
    %cst_13 = arith.constant 5.000000e-01 : f32
    %19 = vector.broadcast %cst_13 : f32 to vector<32x256xf32>
    %20 = arith.addf %18, %19 : vector<32x256xf32>
    %21 = arith.mulf %13, %20 : vector<32x256xf32>
    %22 = vector.broadcast %11 : f32 to vector<32x256xf32>
    %23 = arith.mulf %22, %21 : vector<32x256xf32>
    %24 = vector.broadcast %9 : vector<32x1xf32> to vector<32x256xf32>
    %25 = arith.addf %5, %24 : vector<32x256xf32>
    %cst_14 = arith.constant 5.000000e-01 : f32
    %26 = vector.broadcast %cst_14 : f32 to vector<32x256xf32>
    %27 = arith.mulf %26, %25 : vector<32x256xf32>
    %28 = math.tanh %27 : vector<32x256xf32>
    %cst_15 = arith.constant 5.000000e-01 : f32
    %29 = vector.broadcast %cst_15 : f32 to vector<32x256xf32>
    %30 = arith.mulf %29, %28 : vector<32x256xf32>
    %cst_16 = arith.constant 5.000000e-01 : f32
    %31 = vector.broadcast %cst_16 : f32 to vector<32x256xf32>
    %32 = arith.addf %30, %31 : vector<32x256xf32>
    %33 = arith.mulf %25, %32 : vector<32x256xf32>
    %34 = vector.broadcast %10 : f32 to vector<32x256xf32>
    %35 = arith.mulf %34, %33 : vector<32x256xf32>
    %36 = arith.addf %23, %35 : vector<32x256xf32>
    %37 = arith.index_cast %arg0 : i32 to index
    %38 = memref.load %arg6[%37] : memref<2xf32, #tpu.memory_space<smem>>
    %39 = arith.truncf %36 : vector<32x256xf32> to vector<32x256xbf16>
    %cst_17 = arith.constant dense<0.000000e+00> : vector<4x256xf32>
    %40 = tpu.matmul %4, %39, %cst_17 {dimension_numbers = #tpu.dot_dimension_numbers<[1], [0], [0], [1], [0, 0, 1, 1], [], []>} : vector<4x32xbf16>, vector<32x256xbf16>, vector<4x256xf32> -> vector<4x256xf32>
    %41 = vector.broadcast %38 : f32 to vector<4x256xf32>
    %42 = arith.mulf %40, %41 : vector<4x256xf32>
    %c0_18 = arith.constant 0 : index
    %c0_19 = arith.constant 0 : index
    %c0_20 = arith.constant 0 : index
    %43 = vector.load %arg8[%c0_18, %c0_19, %c0_20] : memref<1x4x256xf32, #tpu.memory_space<vmem>>, vector<1x4x256xf32>
    %44 = vector.shape_cast %43 : vector<1x4x256xf32> to vector<4x256xf32>
    %45 = vector.shape_cast %42 : vector<4x256xf32> to vector<1x4x256xf32>
    tpu.vector_store %arg8[%c0_18, %c0_19, %c0_20], %45 {strides = array<i32>} : memref<1x4x256xf32, #tpu.memory_space<vmem>>, vector<1x4x256xf32>,
    return
  }
  func.func @transform_0(%arg0: i32, %arg1: i32) -> (i32, i32, i32) {
    %c0_i32 = arith.constant 0 : i32
    %c0_i32_0 = arith.constant 0 : i32
    return %arg0, %c0_i32, %arg1 : i32, i32, i32
  }
  func.func @transform_1(%arg0: i32, %arg1: i32) -> (i32, i32) {
    %c0_i32 = arith.constant 0 : i32
    %c0_i32_0 = arith.constant 0 : i32
    %c0_i32_1 = arith.constant 0 : i32
    return %c0_i32, %c0_i32_0 : i32, i32
  }
  func.func @transform_2(%arg0: i32, %arg1: i32) -> (i32, i32) {
    %c0_i32 = arith.constant 0 : i32
    %c0_i32_0 = arith.constant 0 : i32
    %c0_i32_1 = arith.constant 0 : i32
    return %c0_i32, %c0_i32_0 : i32, i32
  }
  func.func @transform_3(%arg0: i32, %arg1: i32) -> (i32, i32, i32) {
    %c0_i32 = arith.constant 0 : i32
    %c0_i32_0 = arith.constant 0 : i32
    %c0_i32_1 = arith.constant 0 : i32
    return %arg0, %c0_i32, %c0_i32_0 : i32, i32, i32
  }
  func.func @transform_4(%arg0: i32, %arg1: i32) -> i32 {
    %c0_i32 = arith.constant 0 : i32
    %c0_i32_0 = arith.constant 0 : i32
    return %c0_i32 : i32
  }
  func.func @transform_5(%arg0: i32, %arg1: i32) -> i32 {
    %c0_i32 = arith.constant 0 : i32
    %c0_i32_0 = arith.constant 0 : i32
    return %c0_i32 : i32
  }
  func.func @transform_6(%arg0: i32, %arg1: i32) -> (i32, i32, i32) {
    %c0_i32 = arith.constant 0 : i32
    %c0_i32_0 = arith.constant 0 : i32
    return %arg0, %c0_i32, %arg1 : i32, i32, i32
  }
}

</mosaic_0001>

<llo_original>
// kernel: tpu_custom_call.1
$region0: #{tpu_custom_call.1}
  #allocation0 [shape = 'u32[]', space=smem, size = 0x4, offset = 0x4, fixed_abs, tag = 'smem constant byte address 0x4 - core index']
  #allocation1 [shape = 'u32[144,128]{1,0:T(1,128)}', space=vmem, size = 0x12000, scoped, tag = 'internal scratch']
  #allocation2 [shape = 'f32[1]{0:T(128)S(6)}', space=smem, size = 0x200, scoped, tag = 'scoped memory for tpu_custom_call.1']
  %s0 = inlined_call_operand.vmem [shape: f32[2,4,256], index: 0, kind: input, shape index: {}]
  %s1 = inlined_call_operand.vmem [shape: bf16[32,4], index: 1, kind: input, shape index: {}]
  %s2 = inlined_call_operand.vmem [shape: bf16[4,32], index: 2, kind: input, shape index: {}]
  %s3 = inlined_call_operand.vmem [shape: f32[2,32,2], index: 3, kind: input, shape index: {}]
  %s4 = inlined_call_operand.vmem [shape: f32[2], index: 4, kind: input, shape index: {}]
  %s5 = inlined_call_operand.<no memory space> [shape: f32[1], index: 5, kind: input, shape index: {}]
  %s6 = inlined_call_operand.hbm [shape: f32[2,4,256], index: 6, kind: output, shape index: {}]
  %s7 = sld [smem:[#allocation0]]
  $region61: #{tpu_custom_call.1} parent=0
    _
  %s9 = ssub.s32 1, %s7
  %s10 = scalar_select 0, %s9, %s7
  %11 = sst [smem:[#allocation2]] %s5
  $region1: #{tpu_custom_call.1} parent=0
    #allocation3 [shape = 'u8[512]{0}', space=smem, size = 0x200, scoped, tag = 'input window, operand 4, single buffered']
    #allocation4 [shape = 's32[2]{0}', space=sflag, size = 0x8, scoped, tag = 'scoped memory for tpu_custom_call.1']
    #allocation5 [shape = 's32[2]{0}', space=sflag, size = 0x8, scoped, tag = 'scoped memory for tpu_custom_call.1']
    #allocation6 [shape = 'u8[8192]{0}', space=vmem, size = 0x2000, scoped, tag = 'output window, operand 0']
    %12 = vsyncpa [#allocation5], 0
    %13 = vsyncpa [#allocation4], 0
    %s14 = scalar_lea.sflag [#allocation4], 1
    %15 = vsyncpa %s14, 0
    loop: start=0, step=1, limit=4
    $region2: #{tpu_custom_call.1} parent=1 // loop_pre_header
      _
    $region3: #{tpu_custom_call.1} parent=1 // loop_header
      %s17 = sphi 0, %s21
      %p18 = scmp.ge.s32.totalorder %s17, 4
      %s24 = sphi 0, %s36
      %s25 = sphi 0, %s32
      %s26 = sphi 0, %s24
      %s27 = sphi 0, %s25
      %s28 = sphi 0, %s26
      %s29 = sphi 0, %s27
      %s41 = sphi 0, %s43
      %s44 = sphi 0, %s41
      %s45 = sphi 0, %s44
      %s61 = sphi 0, %s45
      %s65 = sphi 0, %s65
      %s67 = sphi 0, %s65
      %s68 = sphi 0, %s67
      %s82 = sphi 0, %s68
      %s86 = sphi 0, %s86
      %s88 = sphi 0, %s86
      %s89 = sphi 0, %s88
      %s103 = sphi 0, %s89
      %s109 = sphi 0, %s111
      %s112 = sphi 0, %s109
      %s113 = sphi 0, %s112
      %s129 = sphi 0, %s113
      %s133 = sphi 0, %s133
      %s135 = sphi 0, %s133
      %s136 = sphi 0, %s135
      %s150 = sphi 0, %s136
      %s154 = sphi 0, %s154
      %s156 = sphi 0, %s154
      %s157 = sphi 0, %s156
      %s171 = sphi 0, %s157
      %s179 = sphi 0, %s181
      %s182 = sphi 0, %s179
      %s183 = sphi 0, %s182
      %s199 = sphi 0, %s183
    $region4: #{tpu_custom_call.1} parent=1 // loop_header_branch
      %20 = sbr.rel (%p18) target = $region8
    $region5: #{tpu_custom_call.1} parent=1 // loop_body
      %s22 = ssub.s32 %s17, 1
      %s23 = ssub.s32 %s17, 2
      %s30 = sadd.s32 1, %s25
      %p31 = scmp.ge.s32.totalorder %s30, 1
      %s32 = scalar_select %p31, 0, %s30
      %s33 = sadd.s32 1, %s24
      %s34 = scalar_select %p31, %s33, %s24
      %p35 = scmp.ge.s32.totalorder %s34, 2
      %s36 = scalar_select %p35, 0, %s34
      %s37 = ssub.s32 %s24, %s36
      %s38 = ssub.s32 %s25, %s32
      %s39 = sor.u32 %s37, %s38
      %p40 = scmp.eq.s32.totalorder %s39, 0
      %s42 = sadd.s32 %s41, 1
      %s43 = scalar_select %p40, %s41, %s42
      %p46 = pneg %p40
      %p47 = scmp.eq.s32.totalorder %s17, 1
      %p48 = por %p46, %p47
      %p49 = scmp.ne.s32.totalorder %s41, %s44
      %p50 = scmp.eq.s32.totalorder %s17, 0
      %p51 = por %p49, %p50
      %p52 = scmp.ne.s32.totalorder %s41, %s44
      %p53 = scmp.eq.s32.totalorder %s22, 1
      %p54 = por %p52, %p53
      %p55 = scmp.ne.s32.totalorder %s44, %s45
      %p56 = scmp.eq.s32.totalorder %s22, 0
      %p57 = por %p55, %p56
      %p58 = scmp.ne.s32.totalorder %s44, %s45
      %p59 = scmp.eq.s32.totalorder %s23, 1
      %p60 = por %p58, %p59
      %p62 = scmp.ne.s32.totalorder %s45, %s61
      %p63 = scmp.eq.s32.totalorder %s23, 0
      %p64 = por %p62, %p63
      %s66 = sadd.s32 %s65, 1
      %p69 = scmp.eq.s32.totalorder %s17, 1
      %p70 = scmp.ne.s32.totalorder %s65, %s67
      %p71 = scmp.eq.s32.totalorder %s17, 0
      %p72 = por %p70, %p71
      %p73 = scmp.ne.s32.totalorder %s65, %s67
      %p74 = scmp.eq.s32.totalorder %s22, 1
      %p75 = por %p73, %p74
      %p76 = scmp.ne.s32.totalorder %s67, %s68
      %p77 = scmp.eq.s32.totalorder %s22, 0
      %p78 = por %p76, %p77
      %p79 = scmp.ne.s32.totalorder %s67, %s68
      %p80 = scmp.eq.s32.totalorder %s23, 1
      %p81 = por %p79, %p80
      %p83 = scmp.ne.s32.totalorder %s68, %s82
      %p84 = scmp.eq.s32.totalorder %s23, 0
      %p85 = por %p83, %p84
      %s87 = sadd.s32 %s86, 1
      %p90 = scmp.eq.s32.totalorder %s17, 1
      %p91 = scmp.ne.s32.totalorder %s86, %s88
      %p92 = scmp.eq.s32.totalorder %s17, 0
      %p93 = por %p91, %p92
      %p94 = scmp.ne.s32.totalorder %s86, %s88
      %p95 = scmp.eq.s32.totalorder %s22, 1
      %p96 = por %p94, %p95
      %p97 = scmp.ne.s32.totalorder %s88, %s89
      %p98 = scmp.eq.s32.totalorder %s22, 0
      %p99 = por %p97, %p98
      %p100 = scmp.ne.s32.totalorder %s88, %s89
      %p101 = scmp.eq.s32.totalorder %s23, 1
      %p102 = por %p100, %p101
      %p104 = scmp.ne.s32.totalorder %s89, %s103
      %p105 = scmp.eq.s32.totalorder %s23, 0
      %p106 = por %p104, %p105
      %s107 = ssub.s32 %s24, %s36
      %p108 = scmp.eq.s32.totalorder %s107, 0
      %s110 = sadd.s32 %s109, 1
      %s111 = scalar_select %p108, %s109, %s110
      %p114 = pneg %p108
      %p115 = scmp.eq.s32.totalorder %s17, 1
      %p116 = por %p114, %p115
      %p117 = scmp.ne.s32.totalorder %s109, %s112
      %p118 = scmp.eq.s32.totalorder %s17, 0
      %p119 = por %p117, %p118
      %p120 = scmp.ne.s32.totalorder %s109, %s112
      %p121 = scmp.eq.s32.totalorder %s22, 1
      %p122 = por %p120, %p121
      %p123 = scmp.ne.s32.totalorder %s112, %s113
      %p124 = scmp.eq.s32.totalorder %s22, 0
      %p125 = por %p123, %p124
      %p126 = scmp.ne.s32.totalorder %s112, %s113
      %p127 = scmp.eq.s32.totalorder %s23, 1
      %p128 = por %p126, %p127
      %p130 = scmp.ne.s32.totalorder %s113, %s129
      %p131 = scmp.eq.s32.totalorder %s23, 0
      %p132 = por %p130, %p131
      %s134 = sadd.s32 %s133, 1
      %p137 = scmp.eq.s32.totalorder %s17, 1
      %p138 = scmp.ne.s32.totalorder %s133, %s135
      %p139 = scmp.eq.s32.totalorder %s17, 0
      %p140 = por %p138, %p139
      %p141 = scmp.ne.s32.totalorder %s133, %s135
      %p142 = scmp.eq.s32.totalorder %s22, 1
      %p143 = por %p141, %p142
      %p144 = scmp.ne.s32.totalorder %s135, %s136
      %p145 = scmp.eq.s32.totalorder %s22, 0
      %p146 = por %p144, %p145
      %p147 = scmp.ne.s32.totalorder %s135, %s136
      %p148 = scmp.eq.s32.totalorder %s23, 1
      %p149 = por %p147, %p148
      %p151 = scmp.ne.s32.totalorder %s136, %s150
      %p152 = scmp.eq.s32.totalorder %s23, 0
      %p153 = por %p151, %p152
      %s155 = sadd.s32 %s154, 1
      %p158 = scmp.eq.s32.totalorder %s17, 1
      %p159 = scmp.ne.s32.totalorder %s154, %s156
      %p160 = scmp.eq.s32.totalorder %s17, 0
      %p161 = por %p159, %p160
      %p162 = scmp.ne.s32.totalorder %s154, %s156
      %p163 = scmp.eq.s32.totalorder %s22, 1
      %p164 = por %p162, %p163
      %p165 = scmp.ne.s32.totalorder %s156, %s157
      %p166 = scmp.eq.s32.totalorder %s22, 0
      %p167 = por %p165, %p166
      %p168 = scmp.ne.s32.totalorder %s156, %s157
      %p169 = scmp.eq.s32.totalorder %s23, 1
      %p170 = por %p168, %p169
      %p172 = scmp.ne.s32.totalorder %s157, %s171
      %p173 = scmp.eq.s32.totalorder %s23, 0
      %p174 = por %p172, %p173
      %s175 = ssub.s32 %s24, %s36
      %s176 = ssub.s32 %s25, %s32
      %s177 = sor.u32 %s175, %s176
      %p178 = scmp.eq.s32.totalorder %s177, 0
      %s180 = sadd.s32 %s179, 1
      %s181 = scalar_select %p178, %s179, %s180
      %p184 = pneg %p178
      %p185 = scmp.eq.s32.totalorder %s17, 1
      %p186 = por %p184, %p185
      %p187 = scmp.ne.s32.totalorder %s179, %s182
      %p188 = scmp.eq.s32.totalorder %s17, 0
      %p189 = por %p187, %p188
      %p190 = scmp.ne.s32.totalorder %s179, %s182
      %p191 = scmp.eq.s32.totalorder %s22, 1
      %p192 = por %p190, %p191
      %p193 = scmp.ne.s32.totalorder %s182, %s183
      %p194 = scmp.eq.s32.totalorder %s22, 0
      %p195 = por %p193, %p194
      %p196 = scmp.ne.s32.totalorder %s182, %s183
      %p197 = scmp.eq.s32.totalorder %s23, 1
      %p198 = por %p196, %p197
      %p200 = scmp.ne.s32.totalorder %s183, %s199
      %p201 = scmp.eq.s32.totalorder %s23, 0
      %p202 = por %p200, %p201
      %p203 = scmp.le.s32.totalorder 1, %s17
      %p204 = scmp.lt.s32.totalorder %s17, 3
      %p205 = pnand %p203, %p204
      %p206 = pneg %p205
      // Predicated region
      $region9: #{tpu_custom_call.1} parent=5 // pred_check
        _
      $region10: #{tpu_custom_call.1} parent=5 // pred_check_branch
        %208 = sbr.rel (%p205) target = $region12
      $region11: #{tpu_custom_call.1} parent=5 // pred_region
        %s209 = ssub.s32 %s17, 1
        // Predicated region
        $region13: #{tpu_custom_call.1} parent=11 // pred_check
          %p210 = pneg %p78
        $region14: #{tpu_custom_call.1} parent=11 // pred_check_branch
          %212 = sbr.rel (%p210) target = $region16
        $region15: #{tpu_custom_call.1} parent=11 // pred_region
          _
        $region16: #{tpu_custom_call.1} parent=11 // pred_fallthru
          _
        // Predicated region
        $region17: #{tpu_custom_call.1} parent=11 // pred_check
          %p213 = pneg %p99
        $region18: #{tpu_custom_call.1} parent=11 // pred_check_branch
          %215 = sbr.rel (%p213) target = $region20
        $region19: #{tpu_custom_call.1} parent=11 // pred_region
          _
        $region20: #{tpu_custom_call.1} parent=11 // pred_fallthru
          _
        // Predicated region
        $region21: #{tpu_custom_call.1} parent=11 // pred_check
          %p216 = pneg %p146
        $region22: #{tpu_custom_call.1} parent=11 // pred_check_branch
          %218 = sbr.rel (%p216) target = $region24
        $region23: #{tpu_custom_call.1} parent=11 // pred_region
          %s220 = ssub.s32 16, 16
          %221 = vsyncadd [#allocation5], %s220
          %s223 = sshll.u32 %s4, 4
          %s224 = int_to_ptr.vmem [resolvable:$true] %s223
          %226 = dma.vmem_to_smem %s224, 16, [#allocation3], [#allocation5]
        $region24: #{tpu_custom_call.1} parent=11 // pred_fallthru
          _
        // Predicated region
        $region25: #{tpu_custom_call.1} parent=11 // pred_check
          %p227 = pneg %p167
        $region26: #{tpu_custom_call.1} parent=11 // pred_check_branch
          %229 = sbr.rel (%p227) target = $region28
        $region27: #{tpu_custom_call.1} parent=11 // pred_region
          _
        $region28: #{tpu_custom_call.1} parent=11 // pred_fallthru
          _
      $region12: #{tpu_custom_call.1} parent=5 // pred_fallthru
        _
      %p230 = scmp.lt.s32.totalorder %s17, 2
      // Predicated region
      $region29: #{tpu_custom_call.1} parent=5 // pred_check
        %p231 = pneg %p230
      $region30: #{tpu_custom_call.1} parent=5 // pred_check_branch
        %233 = sbr.rel (%p231) target = $region32
      $region31: #{tpu_custom_call.1} parent=5 // pred_region
        // Predicated region
        $region33: #{tpu_custom_call.1} parent=31 // pred_check
          %p234 = pneg %p51
        $region34: #{tpu_custom_call.1} parent=31 // pred_check_branch
          %236 = sbr.rel (%p234) target = $region36
        $region35: #{tpu_custom_call.1} parent=31 // pred_region
          %s237 = smul.u32 2, %s25
          %p238 = scmp.lt.s32.totalorder %s24, 1
          %s239 = scalar_select %p238, %s24, 1
          %p240 = scmp.lt.s32.totalorder %s237, 1
          %s241 = scalar_select %p240, %s237, 1
          %s242 = smul.addr %s239, 2
          %s243 = sadd.s32 %s241, %s242
          %s244 = smul.addr %s243, 4
          %s245 = scalar_lea.vmem %s0, %s244
          %s246 = smul.u32 2, %s25
        $region36: #{tpu_custom_call.1} parent=31 // pred_fallthru
          _
        // Predicated region
        $region37: #{tpu_custom_call.1} parent=31 // pred_check
          %p247 = pneg %p119
        $region38: #{tpu_custom_call.1} parent=31 // pred_check_branch
          %249 = sbr.rel (%p247) target = $region40
        $region39: #{tpu_custom_call.1} parent=31 // pred_region
          %p250 = scmp.lt.s32.totalorder %s24, 1
          %s251 = scalar_select %p250, %s24, 1
          %s252 = smul.addr %s251, 4
          %s253 = smul.addr %s252, 8
          %s254 = scalar_lea.vmem %s3, %s253
        $region40: #{tpu_custom_call.1} parent=31 // pred_fallthru
          _
      $region32: #{tpu_custom_call.1} parent=5 // pred_fallthru
        _
      %p255 = scmp.le.s32.totalorder 1, %s17
      %p256 = scmp.lt.s32.totalorder %s17, 3
      %p257 = pnand %p255, %p256
      %p258 = pneg %p257
      // Predicated region
      $region41: #{tpu_custom_call.1} parent=5 // pred_check
        _
      $region42: #{tpu_custom_call.1} parent=5 // pred_check_branch
        %260 = sbr.rel (%p257) target = $region44
      $region43: #{tpu_custom_call.1} parent=5 // pred_region
        %s261 = ssub.s32 %s17, 1
        // Predicated region
        $region45: #{tpu_custom_call.1} parent=43 // pred_check
          %p262 = pneg %p146
        $region46: #{tpu_custom_call.1} parent=43 // pred_check_branch
          %264 = sbr.rel (%p262) target = $region48
        $region47: #{tpu_custom_call.1} parent=43 // pred_region
          %265 = dma.done [#allocation5], 16
        $region48: #{tpu_custom_call.1} parent=43 // pred_fallthru
          _
        %266 = sfence
        %s267 = smul.u32 2, %s27
        %p268 = scmp.lt.s32.totalorder %s26, 1
        %s269 = scalar_select %p268, %s26, 1
        %p270 = scmp.lt.s32.totalorder %s267, 1
        %s271 = scalar_select %p270, %s267, 1
        %s272 = smul.addr %s269, 2
        %s273 = sadd.s32 %s271, %s272
        %s274 = smul.addr %s273, 4
        %s275 = scalar_lea.vmem %s0, %s274
        %p276 = pneg %p57
        %p277 = pneg %p54
        %p278 = pneg %p78
        %p279 = pneg %p75
        %p280 = pneg %p99
        %p281 = pneg %p96
        %p282 = scmp.lt.s32.totalorder %s26, 1
        %s283 = scalar_select %p282, %s26, 1
        %s284 = smul.addr %s283, 4
        %s285 = smul.addr %s284, 8
        %s286 = scalar_lea.vmem %s3, %s285
        %p287 = pneg %p125
        %p288 = pneg %p122
        %p289 = pneg %p146
        %p290 = pneg %p143
        %p291 = pneg %p167
        %p292 = pneg %p164
        %p293 = pneg %p195
        %p294 = pneg %p192
        %s295 = sand.u32 %s182, 1
        %s296 = scalar_lea.sflag [#allocation4], %s295
        %s297 = sand.u32 %s182, 1
        %s298 = smul.addr %s297, 8
        %s299 = scalar_lea.vmem [#allocation6], %s298
        %s300 = smul.u32 2, %s27
        %p301 = scmp.lt.s32.totalorder %s26, 1
        %s302 = scalar_select %p301, %s26, 1
        %p303 = scmp.lt.s32.totalorder %s300, 1
        %s304 = scalar_select %p303, %s300, 1
        %s305 = smul.addr %s302, 2
        %s306 = sadd.s32 %s304, %s305
        %s307 = smul.addr %s306, 4
        %s308 = scalar_lea.vmem %s0, %s307
        %s309 = smul.u32 2, %s27
        %p310 = scmp.lt.s32.totalorder %s26, 1
        %s311 = scalar_select %p310, %s26, 1
        %s312 = smul.addr %s311, 4
        %s313 = smul.addr %s312, 8
        %s314 = scalar_lea.vmem %s3, %s313
        %s315 = smul.u32 2, %s27
        %v317 = vld [vmem:[%s308] sm:$0xff]
        %v319 = vcombine.high %v317, %v317
        %v321 = vpack.c.bf16 %v317, %v317
        %v322 = vpack.c.bf16 %v319, %v319
        %v323 = vld [vmem:[%s1] sm:$0xf]
        %v324 = vld [vmem:[%s1 + $0x4] sm:$0xf]
        %v325 = vld [vmem:[%s1 + $0x8] sm:$0xf]
        %v326 = vld [vmem:[%s1 + $0xc] sm:$0xf]
        %v327 = vld [vmem:[%s2] sm:$0x3]
        %v332 = vunpack.c.l.b16 %v323
        %v333 = vunpack.c.l.b16 %v324
        %v334 = vunpack.c.l.b16 %v325
        %v335 = vunpack.c.l.b16 %v326
        %v336 = vpack.c.b16 %v333, %v332
        %v337 = vpack.c.b16 %v335, %v334
        %vm338 = vcmask 31744
        %v340 = vsel %vm338, %v336, 0
        %v343 = vsel %vm338, %v337, 0
        %vm345 = vcmask 1041408
        %v347 = vsel %vm345, %v321, 0
        %v350 = vsel %vm345, %v322, 0
        %352 = vmatprep.subr.bf16.mxu0 %v350
        %353 = vmatpush1.bf16.msra.mxu0 %v347
        %354 = vmatprep.subr.bf16.mxu0 0
        %355 = vmatpush1.bf16.msra.mxu0 0
        %356 = vmatprep.subr.bf16.mxu0 0
        %357 = vmatpush1.bf16.msra.mxu0 0
        %358 = vmatprep.subr.bf16.mxu0 0
        %359 = vmatpush1.bf16.msra.mxu0 0
        %360 = vmatprep.subr.bf16.mxu0 0
        %361 = vmatpush1.bf16.msra.mxu0 0
        %362 = vmatprep.subr.bf16.mxu0 0
        %363 = vmatpush1.bf16.msra.mxu0 0
        %364 = vmatprep.subr.bf16.mxu0 0
        %365 = vmatpush1.bf16.msra.mxu0 0
        %366 = vmatprep.subr.bf16.mxu0 0
        %367 = vmatpush1.bf16.msra.mxu0 0
        %368 = vmatprep.subr.bf16.mxu0 0
        %369 = vmatpush1.bf16.msra.mxu0 0
        %370 = vmatprep.subr.bf16.mxu0 0
        %371 = vmatpush1.bf16.msra.mxu0 0
        %372 = vmatprep.subr.bf16.mxu0 0
        %373 = vmatpush1.bf16.msra.mxu0 0
        %374 = vmatprep.subr.bf16.mxu0 0
        %375 = vmatpush1.bf16.msra.mxu0 0
        %376 = vmatprep.subr.bf16.mxu0 0
        %377 = vmatpush1.bf16.msra.mxu0 0
        %378 = vmatprep.subr.bf16.mxu0 0
        %379 = vmatpush1.bf16.msra.mxu0 0
        %380 = vmatprep.subr.bf16.mxu0 0
        %381 = vmatpush1.bf16.msra.mxu0 0
        %382 = vmatprep.subr.bf16.mxu0 0
        %383 = vmatpush1.bf16.msra.mxu0 0
        %384 = vmatprep.mubr.bf16.mxu0 0
        %385 = vmatmul.mubr.bf16.gmra.mrb[0].mxu0 %v340
        %v386 = vpop.f32.mrb[0].mxu0
        %v387 = vadd.f32 0.0, %v386
        %v388 = vpop.f32.mrb[0].mxu0
        %v389 = vadd.f32 0.0, %v388
        %v390 = vpop.f32.mrb[0].mxu0
        %v391 = vadd.f32 0.0, %v390
        %v392 = vpop.f32.mrb[0].mxu0
        %v393 = vadd.f32 0.0, %v392
        %394 = vmatprep.mubr.bf16.mxu0 0
        %395 = vmatmul.mubr.bf16.gmra.mrb[0].mxu0 %v343
        %v396 = vpop.f32.mrb[0].mxu0
        %v397 = vadd.f32 0.0, %v396
        %v398 = vpop.f32.mrb[0].mxu0
        %v399 = vadd.f32 0.0, %v398
        %v400 = vpop.f32.mrb[0].mxu0
        %v401 = vadd.f32 0.0, %v400
        %v402 = vpop.f32.mrb[0].mxu0
        %v403 = vadd.f32 0.0, %v402
        %404 = vdwg.mxu0
        %v405 = vld [vmem:[%s314] sm:$0xff]
        %v406 = vld [vmem:[%s314 + $0x8] sm:$0xff]
        %v407 = vld [vmem:[%s314 + $0x10] sm:$0xff]
        %v408 = vld [vmem:[%s314 + $0x18] sm:$0xff]
        %s409 = sld [smem:[#allocation2]]
        %s410 = ssub.f32 1.0, %s409
        %412 = vset.pattern.permute.xlu0 0
        %413 = vperm.xlu0 %412, %v405
        %v414 = vpop.permute.xlu0 %413
        %417 = vset.pattern.permute.xlu0 0
        %418 = vperm.xlu0 %417, %v406
        %v419 = vpop.permute.xlu0 %418
        %422 = vset.pattern.permute.xlu0 0
        %423 = vperm.xlu0 %422, %v407
        %v424 = vpop.permute.xlu0 %423
        %427 = vset.pattern.permute.xlu0 0
        %428 = vperm.xlu0 %427, %v408
        %v429 = vpop.permute.xlu0 %428
        %v431 = vadd.f32 %v387, %v414
        %v432 = vadd.f32 %v389, %v414
        %v433 = vadd.f32 %v391, %v419
        %v434 = vadd.f32 %v393, %v419
        %v435 = vadd.f32 %v397, %v424
        %v436 = vadd.f32 %v399, %v424
        %v437 = vadd.f32 %v401, %v429
        %v438 = vadd.f32 %v403, %v429
        %v439 = vmul.f32 %v431, 0.5
        %v440 = vmul.f32 %v432, 0.5
        %v441 = vmul.f32 %v433, 0.5
        %v442 = vmul.f32 %v434, 0.5
        %v443 = vmul.f32 %v435, 0.5
        %v444 = vmul.f32 %v436, 0.5
        %v445 = vmul.f32 %v437, 0.5
        %v446 = vmul.f32 %v438, 0.5
        %v447 = vtanh.pop %v439
        %v448 = vtanh.pop %v440
        %v449 = vtanh.pop %v441
        %v450 = vtanh.pop %v442
        %v451 = vtanh.pop %v443
        %v452 = vtanh.pop %v444
        %v453 = vtanh.pop %v445
        %v454 = vtanh.pop %v446
        %v455 = vmul.f32 %v447, 0.5
        %v456 = vmul.f32 %v448, 0.5
        %v457 = vmul.f32 %v449, 0.5
        %v458 = vmul.f32 %v450, 0.5
        %v459 = vmul.f32 %v451, 0.5
        %v460 = vmul.f32 %v452, 0.5
        %v461 = vmul.f32 %v453, 0.5
        %v462 = vmul.f32 %v454, 0.5
        %v463 = vadd.f32 %v455, 0.5
        %v464 = vadd.f32 %v456, 0.5
        %v465 = vadd.f32 %v457, 0.5
        %v466 = vadd.f32 %v458, 0.5
        %v467 = vadd.f32 %v459, 0.5
        %v468 = vadd.f32 %v460, 0.5
        %v469 = vadd.f32 %v461, 0.5
        %v470 = vadd.f32 %v462, 0.5
        %v471 = vmul.f32 %v431, %v463
        %v472 = vmul.f32 %v432, %v464
        %v473 = vmul.f32 %v433, %v465
        %v474 = vmul.f32 %v434, %v466
        %v475 = vmul.f32 %v435, %v467
        %v476 = vmul.f32 %v436, %v468
        %v477 = vmul.f32 %v437, %v469
        %v478 = vmul.f32 %v438, %v470
        %v479 = vstv %s410
        %v480 = vmul.f32 %v479, %v471
        %v481 = vmul.f32 %v479, %v472
        %v482 = vmul.f32 %v479, %v473
        %v483 = vmul.f32 %v479, %v474
        %v484 = vmul.f32 %v479, %v475
        %v485 = vmul.f32 %v479, %v476
        %v486 = vmul.f32 %v479, %v477
        %v487 = vmul.f32 %v479, %v478
        %488 = vset.pattern.permute.xlu0 1
        %489 = vperm.xlu0 %488, %v405
        %v490 = vpop.permute.xlu0 %489
        %492 = vset.pattern.permute.xlu0 1
        %493 = vperm.xlu0 %492, %v406
        %v494 = vpop.permute.xlu0 %493
        %496 = vset.pattern.permute.xlu0 1
        %497 = vperm.xlu0 %496, %v407
        %v498 = vpop.permute.xlu0 %497
        %500 = vset.pattern.permute.xlu0 1
        %501 = vperm.xlu0 %500, %v408
        %v502 = vpop.permute.xlu0 %501
        %v504 = vadd.f32 %v387, %v490
        %v505 = vadd.f32 %v389, %v490
        %v506 = vadd.f32 %v391, %v494
        %v507 = vadd.f32 %v393, %v494
        %v508 = vadd.f32 %v397, %v498
        %v509 = vadd.f32 %v399, %v498
        %v510 = vadd.f32 %v401, %v502
        %v511 = vadd.f32 %v403, %v502
        %v512 = vmul.f32 %v504, 0.5
        %v513 = vmul.f32 %v505, 0.5
        %v514 = vmul.f32 %v506, 0.5
        %v515 = vmul.f32 %v507, 0.5
        %v516 = vmul.f32 %v508, 0.5
        %v517 = vmul.f32 %v509, 0.5
        %v518 = vmul.f32 %v510, 0.5
        %v519 = vmul.f32 %v511, 0.5
        %v520 = vtanh.pop %v512
        %v521 = vtanh.pop %v513
        %v522 = vtanh.pop %v514
        %v523 = vtanh.pop %v515
        %v524 = vtanh.pop %v516
        %v525 = vtanh.pop %v517
        %v526 = vtanh.pop %v518
        %v527 = vtanh.pop %v519
        %v528 = vmul.f32 %v520, 0.5
        %v529 = vmul.f32 %v521, 0.5
        %v530 = vmul.f32 %v522, 0.5
        %v531 = vmul.f32 %v523, 0.5
        %v532 = vmul.f32 %v524, 0.5
        %v533 = vmul.f32 %v525, 0.5
        %v534 = vmul.f32 %v526, 0.5
        %v535 = vmul.f32 %v527, 0.5
        %v536 = vadd.f32 %v528, 0.5
        %v537 = vadd.f32 %v529, 0.5
        %v538 = vadd.f32 %v530, 0.5
        %v539 = vadd.f32 %v531, 0.5
        %v540 = vadd.f32 %v532, 0.5
        %v541 = vadd.f32 %v533, 0.5
        %v542 = vadd.f32 %v534, 0.5
        %v543 = vadd.f32 %v535, 0.5
        %v544 = vmul.f32 %v504, %v536
        %v545 = vmul.f32 %v505, %v537
        %v546 = vmul.f32 %v506, %v538
        %v547 = vmul.f32 %v507, %v539
        %v548 = vmul.f32 %v508, %v540
        %v549 = vmul.f32 %v509, %v541
        %v550 = vmul.f32 %v510, %v542
        %v551 = vmul.f32 %v511, %v543
        %v552 = vstv %s409
        %v553 = vmul.f32 %v552, %v544
        %v554 = vmul.f32 %v552, %v545
        %v555 = vmul.f32 %v552, %v546
        %v556 = vmul.f32 %v552, %v547
        %v557 = vmul.f32 %v552, %v548
        %v558 = vmul.f32 %v552, %v549
        %v559 = vmul.f32 %v552, %v550
        %v560 = vmul.f32 %v552, %v551
        %v561 = vadd.f32 %v480, %v553
        %v562 = vadd.f32 %v481, %v554
        %v563 = vadd.f32 %v482, %v555
        %v564 = vadd.f32 %v483, %v556
        %v565 = vadd.f32 %v484, %v557
        %v566 = vadd.f32 %v485, %v558
        %v567 = vadd.f32 %v486, %v559
        %v568 = vadd.f32 %v487, %v560
        %s569 = sld [smem:[#allocation3 + %s26]]
        %v570 = vpack.c.bf16 %v563, %v561
        %v571 = vpack.c.bf16 %v564, %v562
        %v572 = vpack.c.bf16 %v567, %v565
        %v573 = vpack.c.bf16 %v568, %v566
        %vm574 = vcmask 261120
        %v576 = vsel %vm574, %v327, 0
        %578 = vmatprep.subr.bf16.mxu0 %v571
        %579 = vmatpush1.bf16.msra.mxu0 %v570
        %580 = vmatprep.subr.bf16.mxu0 %v573
        %581 = vmatpush1.bf16.msra.mxu0 %v572
        %582 = vmatprep.subr.bf16.mxu0 0
        %583 = vmatpush1.bf16.msra.mxu0 0
        %584 = vmatprep.subr.bf16.mxu0 0
        %585 = vmatpush1.bf16.msra.mxu0 0
        %586 = vmatprep.subr.bf16.mxu0 0
        %587 = vmatpush1.bf16.msra.mxu0 0
        %588 = vmatprep.subr.bf16.mxu0 0
        %589 = vmatpush1.bf16.msra.mxu0 0
        %590 = vmatprep.subr.bf16.mxu0 0
        %591 = vmatpush1.bf16.msra.mxu0 0
        %592 = vmatprep.subr.bf16.mxu0 0
        %593 = vmatpush1.bf16.msra.mxu0 0
        %594 = vmatprep.subr.bf16.mxu0 0
        %595 = vmatpush1.bf16.msra.mxu0 0
        %596 = vmatprep.subr.bf16.mxu0 0
        %597 = vmatpush1.bf16.msra.mxu0 0
        %598 = vmatprep.subr.bf16.mxu0 0
        %599 = vmatpush1.bf16.msra.mxu0 0
        %600 = vmatprep.subr.bf16.mxu0 0
        %601 = vmatpush1.bf16.msra.mxu0 0
        %602 = vmatprep.subr.bf16.mxu0 0
        %603 = vmatpush1.bf16.msra.mxu0 0
        %604 = vmatprep.subr.bf16.mxu0 0
        %605 = vmatpush1.bf16.msra.mxu0 0
        %606 = vmatprep.subr.bf16.mxu0 0
        %607 = vmatpush1.bf16.msra.mxu0 0
        %608 = vmatprep.subr.bf16.mxu0 0
        %609 = vmatpush1.bf16.msra.mxu0 0
        %610 = vmatprep.mubr.bf16.mxu0 0
        %611 = vmatmul.mubr.bf16.gmra.mrb[0].mxu0 %v576
        %v612 = vpop.f32.mrb[0].mxu0
        %v613 = vadd.f32 0.0, %v612
        %v614 = vpop.f32.mrb[0].mxu0
        %v615 = vadd.f32 0.0, %v614
        %v616 = vpop.f32.mrb[0].mxu0
        %v617 = vpop.f32.mrb[0].mxu0
        %618 = vdwg.mxu0
        %v619 = vstv %s569
        %v620 = vmul.f32 %v613, %v619
        %v621 = vmul.f32 %v615, %v619
        %v624 = vcombine.low %v620, %v621
        %626 = vst [vmem:[%s299] sm:$0xff] %v624
        %s627 = sand.u32 %s182, 1
        %s628 = scalar_lea.sflag [#allocation4], %s627
        %s629 = sand.u32 %s182, 1
        %s630 = smul.addr %s629, 8
        %s631 = scalar_lea.vmem [#allocation6], %s630
        // Predicated region
        $region49: #{tpu_custom_call.1} parent=43 // pred_check
          %p632 = pneg %p192
        $region50: #{tpu_custom_call.1} parent=43 // pred_check_branch
          %634 = sbr.rel (%p632) target = $region52
        $region51: #{tpu_custom_call.1} parent=43 // pred_region
          %s635 = smul.u32 2, %s27
          %s637 = ssub.s32 128, 128
          %638 = vsyncadd %s628, %s637
          %s639 = smul.addr %s26, 2
          %s640 = sadd.s32 %s635, %s639
          %s641 = smul.addr %s640, 64
          %s642 = scalar_lea.hbm %s6, %s641
          %s644 = sshll.u32 %s631, 4
          %s645 = int_to_ptr.vmem [resolvable:$true] %s644
          %647 = dma.vmem_to_hbm [thread:$0]  %s645, 128, %s642, %s628
        $region52: #{tpu_custom_call.1} parent=43 // pred_fallthru
          _
      $region44: #{tpu_custom_call.1} parent=5 // pred_fallthru
        _
      %p648 = scmp.le.s32.totalorder 2, %s17
      // Predicated region
      $region53: #{tpu_custom_call.1} parent=5 // pred_check
        %p649 = pneg %p648
      $region54: #{tpu_custom_call.1} parent=5 // pred_check_branch
        %651 = sbr.rel (%p649) target = $region56
      $region55: #{tpu_custom_call.1} parent=5 // pred_region
        %s652 = ssub.s32 %s17, 2
        // Predicated region
        $region57: #{tpu_custom_call.1} parent=55 // pred_check
          %p653 = pneg %p198
        $region58: #{tpu_custom_call.1} parent=55 // pred_check_branch
          %655 = sbr.rel (%p653) target = $region60
        $region59: #{tpu_custom_call.1} parent=55 // pred_region
          %s656 = sand.u32 %s183, 1
          %s657 = scalar_lea.sflag [#allocation4], %s656
          %s658 = sand.u32 %s183, 1
          %s659 = smul.addr %s658, 8
          %s660 = scalar_lea.vmem [#allocation6], %s659
          %661 = dma.done %s657, 128
        $region60: #{tpu_custom_call.1} parent=55 // pred_fallthru
          _
      $region56: #{tpu_custom_call.1} parent=5 // pred_fallthru
        _
    $region6: #{tpu_custom_call.1} parent=1 // loop_footer
      %s21 = sadd.s32 1, %s17
    $region7: #{tpu_custom_call.1} parent=1 // loop_footer_branch
      %16 = sbr.rel target = $region3
    $region8: #{tpu_custom_call.1} parent=1 // loop_exit
      _
    %662 = vsyncpa [#allocation4], 1
    %s663 = scalar_lea.sflag [#allocation4], 1
    %664 = vsyncpa %s663, 1
    %665 = vsyncpa [#allocation5], 1
    %s666 = scalar_lea.sflag [#allocation5], 1
    %667 = vsyncpa %s666, 1

</llo_original>
